<compile_context>
chip_gen: v7x
topology: tpu7x:2x2x1
jax: 0.10.0
libtpu: 0.0.40
codegen_flags: <defaults>
</compile_context>

<pallas_src>
import functools

import jax
import jax.numpy as jnp
from jax import lax
from jax.experimental import pallas as pl
from jax.experimental.pallas import tpu as pltpu


def _round_up(x, m):
    return ((x + m - 1) // m) * m


def _pick_tile(n_padded, tile_cap):
    """Largest t = d*128 such that d divides n_padded/128, t <= tile_cap
    (capped at 1024 for v7x VMEM), and the grid keeps >= 2 blocks per
    parallel axis whenever n_padded allows it (v7x megacore)."""
    m = n_padded // 128
    cap = max(1, min(int(tile_cap) // 128, 8))   # never above 1024
    if m >= 2:
        cap = max(1, min(cap, m // 2))           # >= 2 blocks per axis
    best = 1
    for d in range(1, cap + 1):
        if m % d == 0:
            best = d
    return best * 128


def _inner_product_decoder_kernel(zi_ref, zj_ref, out_ref, *, t, resident):
    # zi_ref: (t, D) i-block of z rows (bf16).
    # zj_ref: (t, D) j-block, or the full (Np, D) z when VMEM-resident.
    if resident:
        j = pl.program_id(1)
        off = pl.multiple_of(j * t, 128)
        zj = zj_ref[pl.ds(off, t), :]
    else:
        zj = zj_ref[...]
    # s = zi @ zj.T without an explicit transpose: contract dim 1 of both
    # operands -> MXU handles the transposed RHS natively, f32 accumulation.
    s = lax.dot_general(
        zi_ref[...],
        zj,
        dimension_numbers=(((1,), (1,)), ((), ())),
        preferred_element_type=jnp.float32,
    )
    # sigmoid(s) == 0.5 * (tanh(0.5 * s) + 1): one EUP pass, no divide.
    out_ref[...] = (0.5 * (jnp.tanh(0.5 * s) + 1.0)).astype(out_ref.dtype)


@functools.partial(jax.jit, static_argnames=("tile", "out_dtype"))
def inner_product_decoder(z, *, tile=1024, out_dtype=jnp.float32):
    """adj = sigmoid(z @ z.T); z: (N, D), returns (N, N) in out_dtype."""
    N, D = z.shape

    # Pad rows only to the next multiple of 128; pick a tile that divides the
    # padded N exactly so there is no over-padded output writeback.
    Np = _round_up(N, 128)
    t = _pick_tile(Np, tile)

    # bf16 matmul inputs (f32 accumulation in-kernel). Cast once here so the
    # streamed DMA bytes are halved as well.
    zb = z.astype(jnp.bfloat16)
    if Np != N:
        zb = jnp.pad(zb, ((0, Np - N), (0, 0)))

    # Keep the whole j-operand VMEM-resident when it is small (<= 2 MiB bf16),
    # removing the per-grid-step j-block re-DMA; conservative enough that the
    # total VMEM footprint stays under v5e's 16 MiB scoped default even with
    # a double-buffered 1024x1024 f32 output tile.
    resident = (Np * D * 2) <= (2 << 20)
    if resident:
        zj_spec = pl.BlockSpec((Np, D), lambda i, j: (0, 0))
    else:
        zj_spec = pl.BlockSpec((t, D), lambda i, j: (j, 0))

    out_bytes = jnp.dtype(out_dtype).itemsize
    grid = (Np // t, Np // t)

    adj = pl.pallas_call(
        functools.partial(_inner_product_decoder_kernel, t=t, resident=resident),
        out_shape=jax.ShapeDtypeStruct((Np, Np), out_dtype),
        grid_spec=pltpu.PrefetchScalarGridSpec(
            num_scalar_prefetch=0,
            grid=grid,
            in_specs=[
                # i-block of z rows, full feature dim (no k loop; D is small).
                pl.BlockSpec((t, D), lambda i, j: (i, 0)),
                # j-operand: resident full array or a (t, D) block.
                zj_spec,
            ],
            out_specs=pl.BlockSpec((t, t), lambda i, j: (i, j)),
        ),
        compiler_params=pltpu.CompilerParams(
            dimension_semantics=("parallel", "parallel"),
        ),
        cost_estimate=pl.CostEstimate(
            flops=2 * Np * Np * D,
            transcendentals=Np * Np,
            bytes_accessed=Np * Np * out_bytes + 2 * Np * D * 2,
        ),
    )(zb, zb)

    if Np != N:
        # Padded rows/cols would hold sigmoid(0)=0.5; slice them away so the
        # module contract ((N, N) output) is preserved.
        adj = adj[:N, :N]
    return adj


def inner_product_decoder_ref(z):
    return jax.nn.sigmoid(z @ z.T)


def _check(z, adj, out_dtype=jnp.float32):
    N = z.shape[0]
    assert adj.shape == (N, N)
    assert adj.dtype == out_dtype
    # Tight check vs. a reference that applies the same bf16 input rounding.
    zb = z.astype(jnp.bfloat16).astype(jnp.float32)
    ref_bf16_in = jax.nn.sigmoid(zb @ zb.T)
    assert jnp.allclose(adj.astype(jnp.float32), ref_bf16_in, atol=2e-3, rtol=2e-3), \
        "mismatch vs bf16-input reference"
    # Loose check vs. the full-f32 reference (only bf16 rounding of inputs).
    ref_f32 = inner_product_decoder_ref(z)
    assert jnp.allclose(adj.astype(jnp.float32), ref_f32, atol=2e-2, rtol=0.0), \
        "mismatch vs f32 reference"


if __name__ == "__main__":
    key = jax.random.PRNGKey(0)

    # Small, node-embedding-shaped test matrix (N multiple of 128).
    k1, k2 = jax.random.split(key)
    z1 = jax.random.normal(k1, (256, 128), dtype=jnp.float32) * 0.1
    adj1 = jax.block_until_ready(inner_product_decoder(z1))
    _check(z1, adj1)

    # Ragged N (exercises the minimal pad-to-128 + post-slice path).
    z2 = jax.random.normal(k2, (200, 64), dtype=jnp.float32) * 0.1
    adj2 = jax.block_until_ready(inner_product_decoder(z2))
    _check(z2, adj2)

    # Optional bf16 output path (halves the dominant writeback bytes).
    adj3 = jax.block_until_ready(
        inner_product_decoder(z1, out_dtype=jnp.bfloat16))
    assert adj3.shape == (256, 256) and adj3.dtype == jnp.bfloat16
    assert jnp.allclose(adj3.astype(jnp.float32),
                        inner_product_decoder_ref(z1), atol=3e-2, rtol=0.0)

    print("KERNEL_OK")
</pallas_src>

<mosaic_0001>
module attributes {stable_mosaic.version = 11 : i64} {
  func.func @_inner_product_decoder_kernel(%arg0: i32, %arg1: i32, %arg2: memref<128x128xbf16, #tpu.memory_space<vmem>>, %arg3: memref<256x128xbf16, #tpu.memory_space<vmem>>, %arg4: memref<128x128xf32, #tpu.memory_space<vmem>>) attributes {dimension_semantics = [#tpu.dimension_semantics<parallel>, #tpu.dimension_semantics<parallel>], iteration_bounds = array<i64: 2, 2>, scalar_prefetch = 0 : i64, scratch_operands = 0 : i64, tpu.core_type = #tpu.core_type<tc>, window_params = [{transform_indices = @transform_0, window_bounds = array<i64: 128, 128>}, {pipeline_mode = #tpu.pipeline_mode<synchronous>, transform_indices = @transform_1, window_bounds = array<i64: 256, 128>}, {transform_indices = @transform_2, window_bounds = array<i64: 128, 128>}]} {
    %c128_i32 = arith.constant 128 : i32
    %0 = arith.muli %arg1, %c128_i32 : i32
    %1 = tpu.assume_multiple %0, 128 : i32
    %2 = arith.index_cast %1 : i32 to index
    %c0 = arith.constant 0 : index
    %3 = vector.load %arg3[%2, %c0] : memref<256x128xbf16, #tpu.memory_space<vmem>>, vector<128x128xbf16>
    %c0_0 = arith.constant 0 : index
    %c0_1 = arith.constant 0 : index
    %4 = vector.load %arg2[%c0_0, %c0_1] : memref<128x128xbf16, #tpu.memory_space<vmem>>, vector<128x128xbf16>
    %cst = arith.constant dense<0.000000e+00> : vector<128x128xf32>
    %5 = tpu.matmul %4, %3, %cst {dimension_numbers = #tpu.dot_dimension_numbers<[1], [1], [0], [0], [0, 0, 1, 0], [], []>} : vector<128x128xbf16>, vector<128x128xbf16>, vector<128x128xf32> -> vector<128x128xf32>
    %cst_2 = arith.constant 5.000000e-01 : f32
    %6 = vector.broadcast %cst_2 : f32 to vector<128x128xf32>
    %7 = arith.mulf %6, %5 : vector<128x128xf32>
    %8 = math.tanh %7 : vector<128x128xf32>
    %cst_3 = arith.constant 1.000000e+00 : f32
    %9 = vector.broadcast %cst_3 : f32 to vector<128x128xf32>
    %10 = arith.addf %8, %9 : vector<128x128xf32>
    %cst_4 = arith.constant 5.000000e-01 : f32
    %11 = vector.broadcast %cst_4 : f32 to vector<128x128xf32>
    %12 = arith.mulf %11, %10 : vector<128x128xf32>
    %c0_5 = arith.constant 0 : index
    %c0_6 = arith.constant 0 : index
    %13 = vector.load %arg4[%c0_5, %c0_6] : memref<128x128xf32, #tpu.memory_space<vmem>>, vector<128x128xf32>
    tpu.vector_store %arg4[%c0_5, %c0_6], %12 {strides = array<i32>} : memref<128x128xf32, #tpu.memory_space<vmem>>, vector<128x128xf32>,
    return
  }
  func.func @transform_0(%arg0: i32, %arg1: i32) -> (i32, i32) {
    %c0_i32 = arith.constant 0 : i32
    %c0_i32_0 = arith.constant 0 : i32
    return %arg0, %c0_i32 : i32, i32
  }
  func.func @transform_1(%arg0: i32, %arg1: i32) -> (i32, i32) {
    %c0_i32 = arith.constant 0 : i32
    %c0_i32_0 = arith.constant 0 : i32
    %c0_i32_1 = arith.constant 0 : i32
    return %c0_i32, %c0_i32_0 : i32, i32
  }
  func.func @transform_2(%arg0: i32, %arg1: i32) -> (i32, i32) {
    %c0_i32 = arith.constant 0 : i32
    return %arg0, %arg1 : i32, i32
  }
}

</mosaic_0001>

<llo_original>
// kernel: inner_product_decoder.1
$region0: #{inner_product_decoder.1}
  #allocation0 [shape = 'u32[]', space=smem, size = 0x4, offset = 0x4, fixed_abs, tag = 'smem constant byte address 0x4 - core index']
  #allocation1 [shape = 'u32[144,128]{1,0:T(1,128)}', space=vmem, size = 0x12000, scoped, tag = 'internal scratch']
  %s0 = inlined_call_operand.vmem [shape: bf16[256,128], index: 0, kind: input, shape index: {}, may-alias: {0,1}]
  %s1 = inlined_call_operand.vmem [shape: bf16[256,128], index: 1, kind: input, shape index: {}, may-alias: {0,1}]
  %s2 = inlined_call_operand.hbm [shape: f32[256,256], index: 2, kind: output, shape index: {}]
  %s3 = sld [smem:[#allocation0]]
  $region41: #{inner_product_decoder.1} parent=0
    _
  %s5 = ssub.s32 1, %s3
  %s6 = scalar_select 0, %s5, %s3
  $region1: #{inner_product_decoder.1} parent=0
    #allocation2 [shape = 'u8[131072]{0}', space=vmem, size = 0x20000, scoped, tag = 'output window, operand 0']
    #allocation3 [shape = 's32[2]{0}', space=sflag, size = 0x8, scoped, tag = 'scoped memory for inner_product_decoder.1']
    %7 = vsyncpa [#allocation3], 0
    %s8 = scalar_lea.sflag [#allocation3], 1
    %9 = vsyncpa %s8, 0
    loop: start=0, step=1, limit=6
    $region2: #{inner_product_decoder.1} parent=1 // loop_pre_header
      _
    $region3: #{inner_product_decoder.1} parent=1 // loop_header
      %s11 = sphi 0, %s15
      %p12 = scmp.ge.s32.totalorder %s11, 6
      %s18 = sphi 0, %s30
      %s19 = sphi 0, %s26
      %s20 = sphi 0, %s18
      %s21 = sphi 0, %s19
      %s22 = sphi 0, %s20
      %s23 = sphi 0, %s21
      %s33 = sphi 0, %s35
      %s36 = sphi 0, %s33
      %s37 = sphi 0, %s36
      %s53 = sphi 0, %s37
      %s57 = sphi 0, %s57
      %s59 = sphi 0, %s57
      %s60 = sphi 0, %s59
      %s74 = sphi 0, %s60
      %s82 = sphi 0, %s84
      %s85 = sphi 0, %s82
      %s86 = sphi 0, %s85
      %s102 = sphi 0, %s86
    $region4: #{inner_product_decoder.1} parent=1 // loop_header_branch
      %14 = sbr.rel (%p12) target = $region8
    $region5: #{inner_product_decoder.1} parent=1 // loop_body
      %s16 = ssub.s32 %s11, 1
      %s17 = ssub.s32 %s11, 2
      %s24 = sadd.s32 1, %s19
      %p25 = scmp.ge.s32.totalorder %s24, 2
      %s26 = scalar_select %p25, 0, %s24
      %s27 = sadd.s32 1, %s18
      %s28 = scalar_select %p25, %s27, %s18
      %p29 = scmp.ge.s32.totalorder %s28, 2
      %s30 = scalar_select %p29, 0, %s28
      %s31 = ssub.s32 %s18, %s30
      %p32 = scmp.eq.s32.totalorder %s31, 0
      %s34 = sadd.s32 %s33, 1
      %s35 = scalar_select %p32, %s33, %s34
      %p38 = pneg %p32
      %p39 = scmp.eq.s32.totalorder %s11, 3
      %p40 = por %p38, %p39
      %p41 = scmp.ne.s32.totalorder %s33, %s36
      %p42 = scmp.eq.s32.totalorder %s11, 0
      %p43 = por %p41, %p42
      %p44 = scmp.ne.s32.totalorder %s33, %s36
      %p45 = scmp.eq.s32.totalorder %s16, 3
      %p46 = por %p44, %p45
      %p47 = scmp.ne.s32.totalorder %s36, %s37
      %p48 = scmp.eq.s32.totalorder %s16, 0
      %p49 = por %p47, %p48
      %p50 = scmp.ne.s32.totalorder %s36, %s37
      %p51 = scmp.eq.s32.totalorder %s17, 3
      %p52 = por %p50, %p51
      %p54 = scmp.ne.s32.totalorder %s37, %s53
      %p55 = scmp.eq.s32.totalorder %s17, 0
      %p56 = por %p54, %p55
      %s58 = sadd.s32 %s57, 1
      %p61 = scmp.eq.s32.totalorder %s11, 3
      %p62 = scmp.ne.s32.totalorder %s57, %s59
      %p63 = scmp.eq.s32.totalorder %s11, 0
      %p64 = por %p62, %p63
      %p65 = scmp.ne.s32.totalorder %s57, %s59
      %p66 = scmp.eq.s32.totalorder %s16, 3
      %p67 = por %p65, %p66
      %p68 = scmp.ne.s32.totalorder %s59, %s60
      %p69 = scmp.eq.s32.totalorder %s16, 0
      %p70 = por %p68, %p69
      %p71 = scmp.ne.s32.totalorder %s59, %s60
      %p72 = scmp.eq.s32.totalorder %s17, 3
      %p73 = por %p71, %p72
      %p75 = scmp.ne.s32.totalorder %s60, %s74
      %p76 = scmp.eq.s32.totalorder %s17, 0
      %p77 = por %p75, %p76
      %s78 = ssub.s32 %s18, %s30
      %s79 = ssub.s32 %s19, %s26
      %s80 = sor.u32 %s78, %s79
      %p81 = scmp.eq.s32.totalorder %s80, 0
      %s83 = sadd.s32 %s82, 1
      %s84 = scalar_select %p81, %s82, %s83
      %p87 = pneg %p81
      %p88 = scmp.eq.s32.totalorder %s11, 3
      %p89 = por %p87, %p88
      %p90 = scmp.ne.s32.totalorder %s82, %s85
      %p91 = scmp.eq.s32.totalorder %s11, 0
      %p92 = por %p90, %p91
      %p93 = scmp.ne.s32.totalorder %s82, %s85
      %p94 = scmp.eq.s32.totalorder %s16, 3
      %p95 = por %p93, %p94
      %p96 = scmp.ne.s32.totalorder %s85, %s86
      %p97 = scmp.eq.s32.totalorder %s16, 0
      %p98 = por %p96, %p97
      %p99 = scmp.ne.s32.totalorder %s85, %s86
      %p100 = scmp.eq.s32.totalorder %s17, 3
      %p101 = por %p99, %p100
      %p103 = scmp.ne.s32.totalorder %s86, %s102
      %p104 = scmp.eq.s32.totalorder %s17, 0
      %p105 = por %p103, %p104
      %p106 = scmp.le.s32.totalorder 1, %s11
      %p107 = scmp.lt.s32.totalorder %s11, 5
      %p108 = pnand %p106, %p107
      %p109 = pneg %p108
      // Predicated region
      $region9: #{inner_product_decoder.1} parent=5 // pred_check
        _
      $region10: #{inner_product_decoder.1} parent=5 // pred_check_branch
        %111 = sbr.rel (%p108) target = $region12
      $region11: #{inner_product_decoder.1} parent=5 // pred_region
        %s112 = ssub.s32 %s11, 1
        // Predicated region
        $region13: #{inner_product_decoder.1} parent=11 // pred_check
          %p113 = pneg %p70
        $region14: #{inner_product_decoder.1} parent=11 // pred_check_branch
          %115 = sbr.rel (%p113) target = $region16
        $region15: #{inner_product_decoder.1} parent=11 // pred_region
          _
        $region16: #{inner_product_decoder.1} parent=11 // pred_fallthru
          _
      $region12: #{inner_product_decoder.1} parent=5 // pred_fallthru
        _
      %p116 = scmp.lt.s32.totalorder %s11, 4
      // Predicated region
      $region17: #{inner_product_decoder.1} parent=5 // pred_check
        %p117 = pneg %p116
      $region18: #{inner_product_decoder.1} parent=5 // pred_check_branch
        %119 = sbr.rel (%p117) target = $region20
      $region19: #{inner_product_decoder.1} parent=5 // pred_region
        // Predicated region
        $region21: #{inner_product_decoder.1} parent=19 // pred_check
          %p120 = pneg %p43
        $region22: #{inner_product_decoder.1} parent=19 // pred_check_branch
          %122 = sbr.rel (%p120) target = $region24
        $region23: #{inner_product_decoder.1} parent=19 // pred_region
          %s123 = smul.u32 16, %s18
          %p124 = scmp.lt.s32.totalorder %s123, 31
          %s125 = scalar_select %p124, %s123, 31
          %s126 = smul.addr %s125, 4
          %s127 = scalar_lea.vmem %s0, %s126
          %s128 = smul.u32 16, %s18
        $region24: #{inner_product_decoder.1} parent=19 // pred_fallthru
          _
      $region20: #{inner_product_decoder.1} parent=5 // pred_fallthru
        _
      %p129 = scmp.le.s32.totalorder 1, %s11
      %p130 = scmp.lt.s32.totalorder %s11, 5
      %p131 = pnand %p129, %p130
      %p132 = pneg %p131
      // Predicated region
      $region25: #{inner_product_decoder.1} parent=5 // pred_check
        _
      $region26: #{inner_product_decoder.1} parent=5 // pred_check_branch
        %134 = sbr.rel (%p131) target = $region28
      $region27: #{inner_product_decoder.1} parent=5 // pred_region
        %s135 = ssub.s32 %s11, 1
        %s136 = smul.u32 16, %s20
        %p137 = scmp.lt.s32.totalorder %s136, 31
        %s138 = scalar_select %p137, %s136, 31
        %s139 = smul.addr %s138, 4
        %s140 = scalar_lea.vmem %s0, %s139
        %p141 = pneg %p49
        %p142 = pneg %p46
        %p143 = pneg %p70
        %p144 = pneg %p67
        %p145 = pneg %p98
        %p146 = pneg %p95
        %s147 = sand.u32 %s85, 1
        %s148 = scalar_lea.sflag [#allocation3], %s147
        %s149 = sand.u32 %s85, 1
        %s150 = smul.addr %s149, 128
        %s151 = scalar_lea.vmem [#allocation2], %s150
        %s152 = smul.u32 16, %s20
        %p153 = scmp.lt.s32.totalorder %s152, 31
        %s154 = scalar_select %p153, %s152, 31
        %s155 = smul.addr %s154, 4
        %s156 = scalar_lea.vmem %s0, %s155
        %s157 = smul.u32 16, %s20
        %s158 = smul.u32 16, %s20
        %s160 = smul.u32 %s21, 128
        %s161 = sshra.s32 %s160, 3
        %s162 = sand.u32 %s160, 7
        %s163 = smul.addr %s161, 4
        %s164 = scalar_lea.vmem %s1, %s163
        %v165 = vld [vmem:[%s164] sm:$0xf]
        %v166 = vld [vmem:[%s164 + $0x4] sm:$0xf]
        %v167 = vld [vmem:[%s164 + $0x8] sm:$0xf]
        %v168 = vld [vmem:[%s164 + $0xc] sm:$0xf]
        %v169 = vld [vmem:[%s164 + $0x10] sm:$0xf]
        %v170 = vld [vmem:[%s164 + $0x14] sm:$0xf]
        %v171 = vld [vmem:[%s164 + $0x18] sm:$0xf]
        %v172 = vld [vmem:[%s164 + $0x1c] sm:$0xf]
        %v173 = vld [vmem:[%s164 + $0x20] sm:$0xf]
        %v174 = vld [vmem:[%s164 + $0x24] sm:$0xf]
        %v175 = vld [vmem:[%s164 + $0x28] sm:$0xf]
        %v176 = vld [vmem:[%s164 + $0x2c] sm:$0xf]
        %v177 = vld [vmem:[%s164 + $0x30] sm:$0xf]
        %v178 = vld [vmem:[%s164 + $0x34] sm:$0xf]
        %v179 = vld [vmem:[%s164 + $0x38] sm:$0xf]
        %v180 = vld [vmem:[%s164 + $0x3c] sm:$0xf]
        %v181 = vld [vmem:[%s156] sm:$0xf]
        %v182 = vld [vmem:[%s156 + $0x4] sm:$0xf]
        %v183 = vld [vmem:[%s156 + $0x8] sm:$0xf]
        %v184 = vld [vmem:[%s156 + $0xc] sm:$0xf]
        %v185 = vld [vmem:[%s156 + $0x10] sm:$0xf]
        %v186 = vld [vmem:[%s156 + $0x14] sm:$0xf]
        %v187 = vld [vmem:[%s156 + $0x18] sm:$0xf]
        %v188 = vld [vmem:[%s156 + $0x1c] sm:$0xf]
        %v189 = vld [vmem:[%s156 + $0x20] sm:$0xf]
        %v190 = vld [vmem:[%s156 + $0x24] sm:$0xf]
        %v191 = vld [vmem:[%s156 + $0x28] sm:$0xf]
        %v192 = vld [vmem:[%s156 + $0x2c] sm:$0xf]
        %v193 = vld [vmem:[%s156 + $0x30] sm:$0xf]
        %v194 = vld [vmem:[%s156 + $0x34] sm:$0xf]
        %v195 = vld [vmem:[%s156 + $0x38] sm:$0xf]
        %v196 = vld [vmem:[%s156 + $0x3c] sm:$0xf]
        %v213 = vunpack.c.l.b16 %v181
        %v214 = vunpack.c.l.b16 %v182
        %v215 = vunpack.c.l.b16 %v183
        %v216 = vunpack.c.l.b16 %v184
        %v217 = vunpack.c.l.b16 %v185
        %v218 = vunpack.c.l.b16 %v186
        %v219 = vunpack.c.l.b16 %v187
        %v220 = vunpack.c.l.b16 %v188
        %v221 = vunpack.c.l.b16 %v189
        %v222 = vunpack.c.l.b16 %v190
        %v223 = vunpack.c.l.b16 %v191
        %v224 = vunpack.c.l.b16 %v192
        %v225 = vunpack.c.l.b16 %v193
        %v226 = vunpack.c.l.b16 %v194
        %v227 = vunpack.c.l.b16 %v195
        %v228 = vunpack.c.l.b16 %v196
        %v229 = vpack.c.b16 %v214, %v213
        %v230 = vpack.c.b16 %v216, %v215
        %v231 = vpack.c.b16 %v218, %v217
        %v232 = vpack.c.b16 %v220, %v219
        %v233 = vpack.c.b16 %v222, %v221
        %v234 = vpack.c.b16 %v224, %v223
        %v235 = vpack.c.b16 %v226, %v225
        %v236 = vpack.c.b16 %v228, %v227
        %v261 = vunpack.c.l.b16 %v165
        %v262 = vunpack.c.l.b16 %v166
        %v263 = vunpack.c.l.b16 %v167
        %v264 = vunpack.c.l.b16 %v168
        %v265 = vunpack.c.l.b16 %v169
        %v266 = vunpack.c.l.b16 %v170
        %v267 = vunpack.c.l.b16 %v171
        %v268 = vunpack.c.l.b16 %v172
        %v269 = vunpack.c.l.b16 %v173
        %v270 = vunpack.c.l.b16 %v174
        %v271 = vunpack.c.l.b16 %v175
        %v272 = vunpack.c.l.b16 %v176
        %v273 = vunpack.c.l.b16 %v177
        %v274 = vunpack.c.l.b16 %v178
        %v275 = vunpack.c.l.b16 %v179
        %v276 = vunpack.c.l.b16 %v180
        %v277 = vpack.c.b16 %v262, %v261
        %v278 = vpack.c.b16 %v264, %v263
        %v279 = vpack.c.b16 %v266, %v265
        %v280 = vpack.c.b16 %v268, %v267
        %v281 = vpack.c.b16 %v270, %v269
        %v282 = vpack.c.b16 %v272, %v271
        %v283 = vpack.c.b16 %v274, %v273
        %v284 = vpack.c.b16 %v276, %v275
        %293 = vmatprep.subr.bf16.mxu0 0
        %294 = vmatpush1.bf16.xpose.msra.mxu0 %v277
        %295 = vmatprep.subr.bf16.mxu0 0
        %296 = vmatpush1.bf16.xpose.msra.mxu0 %v278
        %297 = vmatprep.subr.bf16.mxu0 0
        %298 = vmatpush1.bf16.xpose.msra.mxu0 %v279
        %299 = vmatprep.subr.bf16.mxu0 0
        %300 = vmatpush1.bf16.xpose.msra.mxu0 %v280
        %301 = vmatprep.subr.bf16.mxu0 0
        %302 = vmatpush1.bf16.xpose.msra.mxu0 %v281
        %303 = vmatprep.subr.bf16.mxu0 0
        %304 = vmatpush1.bf16.xpose.msra.mxu0 %v282
        %305 = vmatprep.subr.bf16.mxu0 0
        %306 = vmatpush1.bf16.xpose.msra.mxu0 %v283
        %307 = vmatprep.subr.bf16.mxu0 0
        %308 = vmatpush1.bf16.xpose.msra.mxu0 %v284
        %309 = vmatprep.subr.bf16.mxu0 0
        %310 = vmatpush1.bf16.xpose.msra.mxu0 0
        %311 = vmatprep.subr.bf16.mxu0 0
        %312 = vmatpush1.bf16.xpose.msra.mxu0 0
        %313 = vmatprep.subr.bf16.mxu0 0
        %314 = vmatpush1.bf16.xpose.msra.mxu0 0
        %315 = vmatprep.subr.bf16.mxu0 0
        %316 = vmatpush1.bf16.xpose.msra.mxu0 0
        %317 = vmatprep.subr.bf16.mxu0 0
        %318 = vmatpush1.bf16.xpose.msra.mxu0 0
        %319 = vmatprep.subr.bf16.mxu0 0
        %320 = vmatpush1.bf16.xpose.msra.mxu0 0
        %321 = vmatprep.subr.bf16.mxu0 0
        %322 = vmatpush1.bf16.xpose.msra.mxu0 0
        %323 = vmatprep.subr.bf16.mxu0 0
        %324 = vmatpush1.bf16.xpose.msra.mxu0 0
        %325 = vmatprep.mubr.bf16.mxu0 0
        %326 = vmatmul.mubr.bf16.gmra.mrb[0].mxu0 %v229
        %v327 = vpop.f32.mrb[0].mxu0
        %v328 = vadd.f32 0.0, %v327
        %v329 = vpop.f32.mrb[0].mxu0
        %v330 = vpop.f32.mrb[0].mxu0
        %v331 = vadd.f32 0.0, %v330
        %v332 = vpop.f32.mrb[0].mxu0
        %333 = vmatprep.mubr.bf16.mxu0 0
        %334 = vmatmul.mubr.bf16.gmra.mrb[0].mxu0 %v230
        %v335 = vpop.f32.mrb[0].mxu0
        %v336 = vadd.f32 0.0, %v335
        %v337 = vpop.f32.mrb[0].mxu0
        %v338 = vpop.f32.mrb[0].mxu0
        %v339 = vadd.f32 0.0, %v338
        %v340 = vpop.f32.mrb[0].mxu0
        %341 = vmatprep.mubr.bf16.mxu0 0
        %342 = vmatmul.mubr.bf16.gmra.mrb[0].mxu0 %v231
        %v343 = vpop.f32.mrb[0].mxu0
        %v344 = vadd.f32 0.0, %v343
        %v345 = vpop.f32.mrb[0].mxu0
        %v346 = vpop.f32.mrb[0].mxu0
        %v347 = vadd.f32 0.0, %v346
        %v348 = vpop.f32.mrb[0].mxu0
        %349 = vmatprep.mubr.bf16.mxu0 0
        %350 = vmatmul.mubr.bf16.gmra.mrb[0].mxu0 %v232
        %v351 = vpop.f32.mrb[0].mxu0
        %v352 = vadd.f32 0.0, %v351
        %v353 = vpop.f32.mrb[0].mxu0
        %v354 = vpop.f32.mrb[0].mxu0
        %v355 = vadd.f32 0.0, %v354
        %v356 = vpop.f32.mrb[0].mxu0
        %357 = vmatprep.mubr.bf16.mxu0 0
        %358 = vmatmul.mubr.bf16.gmra.mrb[0].mxu0 %v233
        %v359 = vpop.f32.mrb[0].mxu0
        %v360 = vadd.f32 0.0, %v359
        %v361 = vpop.f32.mrb[0].mxu0
        %v362 = vpop.f32.mrb[0].mxu0
        %v363 = vadd.f32 0.0, %v362
        %v364 = vpop.f32.mrb[0].mxu0
        %365 = vmatprep.mubr.bf16.mxu0 0
        %366 = vmatmul.mubr.bf16.gmra.mrb[0].mxu0 %v234
        %v367 = vpop.f32.mrb[0].mxu0
        %v368 = vadd.f32 0.0, %v367
        %v369 = vpop.f32.mrb[0].mxu0
        %v370 = vpop.f32.mrb[0].mxu0
        %v371 = vadd.f32 0.0, %v370
        %v372 = vpop.f32.mrb[0].mxu0
        %373 = vmatprep.mubr.bf16.mxu0 0
        %374 = vmatmul.mubr.bf16.gmra.mrb[0].mxu0 %v235
        %v375 = vpop.f32.mrb[0].mxu0
        %v376 = vadd.f32 0.0, %v375
        %v377 = vpop.f32.mrb[0].mxu0
        %v378 = vpop.f32.mrb[0].mxu0
        %v379 = vadd.f32 0.0, %v378
        %v380 = vpop.f32.mrb[0].mxu0
        %381 = vmatprep.mubr.bf16.mxu0 0
        %382 = vmatmul.mubr.bf16.gmra.mrb[0].mxu0 %v236
        %v383 = vpop.f32.mrb[0].mxu0
        %v384 = vadd.f32 0.0, %v383
        %v385 = vpop.f32.mrb[0].mxu0
        %v386 = vpop.f32.mrb[0].mxu0
        %v387 = vadd.f32 0.0, %v386
        %v388 = vpop.f32.mrb[0].mxu0
        %389 = vdwg.mxu0
        %v390 = vmul.f32 %v328, 0.5
        %v391 = vmul.f32 %v331, 0.5
        %v392 = vmul.f32 %v336, 0.5
        %v393 = vmul.f32 %v339, 0.5
        %v394 = vmul.f32 %v344, 0.5
        %v395 = vmul.f32 %v347, 0.5
        %v396 = vmul.f32 %v352, 0.5
        %v397 = vmul.f32 %v355, 0.5
        %v398 = vmul.f32 %v360, 0.5
        %v399 = vmul.f32 %v363, 0.5
        %v400 = vmul.f32 %v368, 0.5
        %v401 = vmul.f32 %v371, 0.5
        %v402 = vmul.f32 %v376, 0.5
        %v403 = vmul.f32 %v379, 0.5
        %v404 = vmul.f32 %v384, 0.5
        %v405 = vmul.f32 %v387, 0.5
        %v406 = vtanh.pop %v390
        %v407 = vtanh.pop %v391
        %v408 = vtanh.pop %v392
        %v409 = vtanh.pop %v393
        %v410 = vtanh.pop %v394
        %v411 = vtanh.pop %v395
        %v412 = vtanh.pop %v396
        %v413 = vtanh.pop %v397
        %v414 = vtanh.pop %v398
        %v415 = vtanh.pop %v399
        %v416 = vtanh.pop %v400
        %v417 = vtanh.pop %v401
        %v418 = vtanh.pop %v402
        %v419 = vtanh.pop %v403
        %v420 = vtanh.pop %v404
        %v421 = vtanh.pop %v405
        %v422 = vadd.f32 %v406, 1.0
        %v423 = vadd.f32 %v407, 1.0
        %v424 = vadd.f32 %v408, 1.0
        %v425 = vadd.f32 %v409, 1.0
        %v426 = vadd.f32 %v410, 1.0
        %v427 = vadd.f32 %v411, 1.0
        %v428 = vadd.f32 %v412, 1.0
        %v429 = vadd.f32 %v413, 1.0
        %v430 = vadd.f32 %v414, 1.0
        %v431 = vadd.f32 %v415, 1.0
        %v432 = vadd.f32 %v416, 1.0
        %v433 = vadd.f32 %v417, 1.0
        %v434 = vadd.f32 %v418, 1.0
        %v435 = vadd.f32 %v419, 1.0
        %v436 = vadd.f32 %v420, 1.0
        %v437 = vadd.f32 %v421, 1.0
        %v438 = vmul.f32 %v422, 0.5
        %v439 = vmul.f32 %v423, 0.5
        %v440 = vmul.f32 %v424, 0.5
        %v441 = vmul.f32 %v425, 0.5
        %v442 = vmul.f32 %v426, 0.5
        %v443 = vmul.f32 %v427, 0.5
        %v444 = vmul.f32 %v428, 0.5
        %v445 = vmul.f32 %v429, 0.5
        %v446 = vmul.f32 %v430, 0.5
        %v447 = vmul.f32 %v431, 0.5
        %v448 = vmul.f32 %v432, 0.5
        %v449 = vmul.f32 %v433, 0.5
        %v450 = vmul.f32 %v434, 0.5
        %v451 = vmul.f32 %v435, 0.5
        %v452 = vmul.f32 %v436, 0.5
        %v453 = vmul.f32 %v437, 0.5
        %454 = vst [vmem:[%s151] sm:$0xff] %v438
        %455 = vst [vmem:[%s151 + $0x8] sm:$0xff] %v439
        %456 = vst [vmem:[%s151 + $0x10] sm:$0xff] %v440
        %457 = vst [vmem:[%s151 + $0x18] sm:$0xff] %v441
        %458 = vst [vmem:[%s151 + $0x20] sm:$0xff] %v442
        %459 = vst [vmem:[%s151 + $0x28] sm:$0xff] %v443
        %460 = vst [vmem:[%s151 + $0x30] sm:$0xff] %v444
        %461 = vst [vmem:[%s151 + $0x38] sm:$0xff] %v445
        %462 = vst [vmem:[%s151 + $0x40] sm:$0xff] %v446
        %463 = vst [vmem:[%s151 + $0x48] sm:$0xff] %v447
        %464 = vst [vmem:[%s151 + $0x50] sm:$0xff] %v448
        %465 = vst [vmem:[%s151 + $0x58] sm:$0xff] %v449
        %466 = vst [vmem:[%s151 + $0x60] sm:$0xff] %v450
        %467 = vst [vmem:[%s151 + $0x68] sm:$0xff] %v451
        %468 = vst [vmem:[%s151 + $0x70] sm:$0xff] %v452
        %469 = vst [vmem:[%s151 + $0x78] sm:$0xff] %v453
        %s470 = sand.u32 %s85, 1
        %s471 = scalar_lea.sflag [#allocation3], %s470
        %s472 = sand.u32 %s85, 1
        %s473 = smul.addr %s472, 128
        %s474 = scalar_lea.vmem [#allocation2], %s473
        // Predicated region
        $region29: #{inner_product_decoder.1} parent=27 // pred_check
          %p475 = pneg %p95
        $region30: #{inner_product_decoder.1} parent=27 // pred_check_branch
          %477 = sbr.rel (%p475) target = $region32
        $region31: #{inner_product_decoder.1} parent=27 // pred_region
          %s478 = smul.u32 16, %s20
          %s480 = ssub.s32 2048, 2048
          %481 = vsyncadd %s471, %s480
          %s482 = smul.addr %s478, 2
          %s483 = sadd.s32 %s21, %s482
          %s484 = smul.addr %s483, 128
          %s485 = scalar_lea.hbm %s2, %s484
          %s486 = sshll.u32 %s474, 4
          %s487 = int_to_ptr.vmem [resolvable:$true] %s486
          %492 = dma.vmem_to_hbm [thread:$0]  %s487, 2048, %s485, %s471, 128, 256, 8
        $region32: #{inner_product_decoder.1} parent=27 // pred_fallthru
          _
      $region28: #{inner_product_decoder.1} parent=5 // pred_fallthru
        _
      %p493 = scmp.le.s32.totalorder 2, %s11
      // Predicated region
      $region33: #{inner_product_decoder.1} parent=5 // pred_check
        %p494 = pneg %p493
      $region34: #{inner_product_decoder.1} parent=5 // pred_check_branch
        %496 = sbr.rel (%p494) target = $region36
      $region35: #{inner_product_decoder.1} parent=5 // pred_region
        %s497 = ssub.s32 %s11, 2
        // Predicated region
        $region37: #{inner_product_decoder.1} parent=35 // pred_check
          %p498 = pneg %p101
        $region38: #{inner_product_decoder.1} parent=35 // pred_check_branch
          %500 = sbr.rel (%p498) target = $region40
        $region39: #{inner_product_decoder.1} parent=35 // pred_region
          %s501 = sand.u32 %s86, 1
          %s502 = scalar_lea.sflag [#allocation3], %s501
          %s503 = sand.u32 %s86, 1
          %s504 = smul.addr %s503, 128
          %s505 = scalar_lea.vmem [#allocation2], %s504
          %506 = dma.done %s502, 2048
        $region40: #{inner_product_decoder.1} parent=35 // pred_fallthru
          _
      $region36: #{inner_product_decoder.1} parent=5 // pred_fallthru
        _
    $region6: #{inner_product_decoder.1} parent=1 // loop_footer
      %s15 = sadd.s32 1, %s11
    $region7: #{inner_product_decoder.1} parent=1 // loop_footer_branch
      %10 = sbr.rel target = $region3
    $region8: #{inner_product_decoder.1} parent=1 // loop_exit
      _
    %507 = vsyncpa [#allocation3], 1
    %s508 = scalar_lea.sflag [#allocation3], 1
    %509 = vsyncpa %s508, 1

</llo_original>
